<compile_context>
chip_gen: v6e
topology: v6e:2x2x1
jax: 0.10.0
libtpu: 0.0.40
codegen_flags: <defaults>
</compile_context>

<pallas_src>
import functools

import jax
import jax.numpy as jnp
from jax import lax
from jax.experimental import pallas as pl
from jax.experimental.pallas import tpu as pltpu


def _triplet_loss_kernel(a_ref, p_ref, n_ref, loss_ref, *, margin, tb, total_b):
    """One grid step: per-row triplet losses for one (tb, D) batch tile."""
    i = pl.program_id(0)

    a = a_ref[...]
    p = p_ref[...]
    n = n_ref[...]

    # dp - dn == sum((p - n) * (p + n - 2a), axis=1)  (identical numerics up
    # to rounding; single lane-reduce, keepdims keeps everything 2-D).
    diff = jnp.sum((p - n) * (p + n - 2.0 * a), axis=1, keepdims=True)   # (tb, 1)
    losses = jnp.maximum(diff + jnp.float32(margin), 0.0)                # (tb, 1)

    # Zero out padded rows of a ragged final tile.
    row = i * tb + lax.broadcasted_iota(jnp.int32, (tb, 1), 0)
    loss_ref[...] = jnp.where(row < total_b, losses, 0.0)


# Conservative tile budget: 3 f32 input streams, double-buffered, must fit the
# default scoped VMEM limit on every generation (16 MiB v5e, 32 MiB v6e/v7x).
_TILE_VMEM_BUDGET_BYTES = 12 * 1024 * 1024
_MAX_TB = 1024  # keep multiple blocks for big batches (v7x megacore sharding)


def _pick_tb(B, D):
    bytes_per_row = 3 * D * 4 * 2          # 3 streams * f32 * double buffer
    max_rows = max(8, _TILE_VMEM_BUDGET_BYTES // bytes_per_row)
    tb = min(B, max_rows, _MAX_TB)
    if tb >= B:
        return B                            # single full-array block
    return max(8, (tb // 8) * 8)            # multi-block: sublane-aligned


def my_loss_pallas(anchor, positive, negative, *, margin=1.0, gamma=2.0,
                   size_average=True, tb=None):
    # gamma only appears in calculate_pos_anchor, which forward() never calls;
    # kept for signature parity with the PyTorch module.
    B, D = anchor.shape
    if tb is None:
        tb = _pick_tb(B, D)
    nblocks = -(-B // tb)
    B_pad = nblocks * tb

    anchor = anchor.astype(jnp.float32)
    positive = positive.astype(jnp.float32)
    negative = negative.astype(jnp.float32)
    if B_pad != B:
        pad = ((0, B_pad - B), (0, 0))
        anchor = jnp.pad(anchor, pad)
        positive = jnp.pad(positive, pad)
        negative = jnp.pad(negative, pad)

    kernel = functools.partial(
        _triplet_loss_kernel, margin=float(margin), tb=tb, total_b=B)

    in_spec = pl.BlockSpec((tb, D), lambda i: (i, 0))
    losses = pl.pallas_call(
        kernel,
        out_shape=jax.ShapeDtypeStruct((B_pad, 1), jnp.float32),
        grid_spec=pltpu.PrefetchScalarGridSpec(
            num_scalar_prefetch=0,
            grid=(nblocks,),
            in_specs=[in_spec, in_spec, in_spec],
            out_specs=pl.BlockSpec((tb, 1), lambda i: (i, 0)),
        ),
        compiler_params=pltpu.CompilerParams(
            # each grid step writes an independent output block -> parallel
            dimension_semantics=("parallel",),
        ),
        cost_estimate=pl.CostEstimate(
            flops=6 * B * D,
            transcendentals=0,
            bytes_accessed=3 * B_pad * D * 4 + B_pad * 4,
        ),
    )(anchor, positive, negative)

    total = jnp.sum(losses)                 # padded rows are already zero
    return total / jnp.float32(B) if size_average else total


def _reference(anchor, positive, negative, margin=1.0, size_average=True):
    dp = jnp.sum((anchor - positive) ** 2, axis=1)
    dn = jnp.sum((anchor - negative) ** 2, axis=1)
    losses = jnp.maximum(dp - dn + margin, 0.0)
    return jnp.mean(losses) if size_average else jnp.sum(losses)


if __name__ == "__main__":
    key = jax.random.PRNGKey(0)
    ka, kp, kn = jax.random.split(key, 3)
    B, D = 16, 32  # small shapes: 16 samples, 32-dim embeddings
    anchor = jax.random.normal(ka, (B, D), dtype=jnp.float32)
    positive = jax.random.normal(kp, (B, D), dtype=jnp.float32)
    negative = jax.random.normal(kn, (B, D), dtype=jnp.float32)

    # mean path (size_average=True) — auto tile (single full block here)
    loss = my_loss_pallas(anchor, positive, negative, margin=1.0, gamma=2.0,
                          size_average=True)
    jax.block_until_ready(loss)
    ref = _reference(anchor, positive, negative, 1.0, True)
    assert jnp.allclose(loss, ref, rtol=1e-5, atol=1e-5), (loss, ref)

    # sum path (size_average=False)
    loss_sum = my_loss_pallas(anchor, positive, negative, size_average=False)
    jax.block_until_ready(loss_sum)
    ref_sum = _reference(anchor, positive, negative, 1.0, False)
    assert jnp.allclose(loss_sum, ref_sum, rtol=1e-5, atol=1e-5), (loss_sum, ref_sum)

    # ragged multi-block path: force tb=8 on a batch of 20 (pads to 24, masks)
    k2a, k2p, k2n = jax.random.split(jax.random.PRNGKey(1), 3)
    B2 = 20
    a2 = jax.random.normal(k2a, (B2, D), dtype=jnp.float32)
    p2 = jax.random.normal(k2p, (B2, D), dtype=jnp.float32)
    n2 = jax.random.normal(k2n, (B2, D), dtype=jnp.float32)
    loss2 = my_loss_pallas(a2, p2, n2, size_average=True, tb=8)
    jax.block_until_ready(loss2)
    ref2 = _reference(a2, p2, n2, 1.0, True)
    assert jnp.allclose(loss2, ref2, rtol=1e-5, atol=1e-5), (loss2, ref2)

    print("KERNEL_OK")
</pallas_src>

<mosaic_0001>
module attributes {stable_mosaic.version = 11 : i64} {
  func.func @_triplet_loss_kernel(%arg0: i32, %arg1: memref<16x32xf32, #tpu.memory_space<vmem>>, %arg2: memref<16x32xf32, #tpu.memory_space<vmem>>, %arg3: memref<16x32xf32, #tpu.memory_space<vmem>>, %arg4: memref<16x1xf32, #tpu.memory_space<vmem>>) attributes {dimension_semantics = [#tpu.dimension_semantics<parallel>], iteration_bounds = array<i64: 1>, scalar_prefetch = 0 : i64, scratch_operands = 0 : i64, tpu.core_type = #tpu.core_type<tc>, window_params = [{transform_indices = @transform_0, window_bounds = array<i64: 16, 32>}, {transform_indices = @transform_1, window_bounds = array<i64: 16, 32>}, {transform_indices = @transform_2, window_bounds = array<i64: 16, 32>}, {transform_indices = @transform_3, window_bounds = array<i64: 16, 1>}]} {
    %c0 = arith.constant 0 : index
    %c0_0 = arith.constant 0 : index
    %0 = vector.load %arg1[%c0, %c0_0] : memref<16x32xf32, #tpu.memory_space<vmem>>, vector<16x32xf32>
    %c0_1 = arith.constant 0 : index
    %c0_2 = arith.constant 0 : index
    %1 = vector.load %arg2[%c0_1, %c0_2] : memref<16x32xf32, #tpu.memory_space<vmem>>, vector<16x32xf32>
    %c0_3 = arith.constant 0 : index
    %c0_4 = arith.constant 0 : index
    %2 = vector.load %arg3[%c0_3, %c0_4] : memref<16x32xf32, #tpu.memory_space<vmem>>, vector<16x32xf32>
    %3 = arith.subf %1, %2 : vector<16x32xf32>
    %4 = arith.addf %1, %2 : vector<16x32xf32>
    %cst = arith.constant 2.000000e+00 : f32
    %5 = vector.broadcast %cst : f32 to vector<16x32xf32>
    %6 = arith.mulf %5, %0 : vector<16x32xf32>
    %7 = arith.subf %4, %6 : vector<16x32xf32>
    %8 = arith.mulf %3, %7 : vector<16x32xf32>
    %cst_5 = arith.constant dense<0.000000e+00> : vector<16xf32>
    %9 = vector.multi_reduction <add>, %8, %cst_5 [1] : vector<16x32xf32> to vector<16xf32>
    %10 = vector.shape_cast %9 : vector<16xf32> to vector<16x1xf32>
    %cst_6 = arith.constant 1.000000e+00 : f32
    %11 = vector.broadcast %cst_6 : f32 to vector<16x1xf32>
    %12 = arith.addf %10, %11 : vector<16x1xf32>
    %cst_7 = arith.constant 0.000000e+00 : f32
    %13 = vector.broadcast %cst_7 : f32 to vector<16x1xf32>
    %14 = arith.maximumf %12, %13 : vector<16x1xf32>
    %c16_i32 = arith.constant 16 : i32
    %15 = arith.muli %arg0, %c16_i32 : i32
    %16 = tpu.iota {dimensions = array<i32: 0>} : vector<16x1xi32>
    %17 = vector.broadcast %15 : i32 to vector<16x1xi32>
    %18 = arith.addi %17, %16 : vector<16x1xi32>
    %c16_i32_8 = arith.constant 16 : i32
    %19 = vector.broadcast %c16_i32_8 : i32 to vector<16x1xi32>
    %20 = arith.cmpi slt, %18, %19 : vector<16x1xi32>
    %cst_9 = arith.constant 0.000000e+00 : f32
    %21 = vector.broadcast %cst_9 : f32 to vector<16x1xf32>
    %22 = arith.select %20, %14, %21 : vector<16x1xi1>, vector<16x1xf32>
    %c0_10 = arith.constant 0 : index
    %c0_11 = arith.constant 0 : index
    %23 = vector.load %arg4[%c0_10, %c0_11] : memref<16x1xf32, #tpu.memory_space<vmem>>, vector<16x1xf32>
    tpu.vector_store %arg4[%c0_10, %c0_11], %22 {strides = array<i32>} : memref<16x1xf32, #tpu.memory_space<vmem>>, vector<16x1xf32>,
    return
  }
  func.func @transform_0(%arg0: i32) -> (i32, i32) {
    %c0_i32 = arith.constant 0 : i32
    %c0_i32_0 = arith.constant 0 : i32
    return %arg0, %c0_i32 : i32, i32
  }
  func.func @transform_1(%arg0: i32) -> (i32, i32) {
    %c0_i32 = arith.constant 0 : i32
    %c0_i32_0 = arith.constant 0 : i32
    return %arg0, %c0_i32 : i32, i32
  }
  func.func @transform_2(%arg0: i32) -> (i32, i32) {
    %c0_i32 = arith.constant 0 : i32
    %c0_i32_0 = arith.constant 0 : i32
    return %arg0, %c0_i32 : i32, i32
  }
  func.func @transform_3(%arg0: i32) -> (i32, i32) {
    %c0_i32 = arith.constant 0 : i32
    %c0_i32_0 = arith.constant 0 : i32
    return %arg0, %c0_i32 : i32, i32
  }
}

</mosaic_0001>

<llo_original>
// kernel: tpu_custom_call.1
$region0: #{tpu_custom_call.1}
  #allocation0 [shape = 'u32[]', space=smem, size = 0x4, offset = 0x4, fixed_abs, tag = 'smem constant byte address 0x4 - core index']
  #allocation1 [shape = 'u32[144,128]{1,0:T(1,128)}', space=vmem, size = 0x12000, scoped, tag = 'internal scratch']
  %s0 = inlined_call_operand.hbm [shape: f32[16,32], index: 0, kind: input, shape index: {}]
  %s1 = inlined_call_operand.hbm [shape: f32[16,32], index: 1, kind: input, shape index: {}]
  %s2 = inlined_call_operand.hbm [shape: f32[16,32], index: 2, kind: input, shape index: {}]
  %s3 = inlined_call_operand.vmem [shape: f32[16,1], index: 3, kind: output, shape index: {}]
  %s4 = sld [smem:[#allocation0]]
  $region34: #{tpu_custom_call.1} parent=0
    _
  %s6 = ssub.s32 1, %s4
  %s7 = scalar_select 0, %s6, %s4
  $region1: #{tpu_custom_call.1} parent=0
    #allocation2 [shape = 'u8[8192]{0}', space=vmem, size = 0x2000, scoped, tag = 'input window, operand 0, single buffered']
    #allocation3 [shape = 's32[1]{0}', space=sflag, size = 0x4, scoped, tag = 'scoped memory for tpu_custom_call.1']
    #allocation4 [shape = 'u8[8192]{0}', space=vmem, size = 0x2000, scoped, tag = 'input window, operand 1, single buffered']
    #allocation5 [shape = 's32[1]{0}', space=sflag, size = 0x4, scoped, tag = 'scoped memory for tpu_custom_call.1']
    #allocation6 [shape = 'u8[8192]{0}', space=vmem, size = 0x2000, scoped, tag = 'input window, operand 2, single buffered']
    %8 = vsyncpa [#allocation3], 0
    %9 = vsyncpa [#allocation5], 0
    // Predicated region
    $region2: #{tpu_custom_call.1} parent=1 // pred_check
      _
    $region3: #{tpu_custom_call.1} parent=1 // pred_check_branch
      %11 = sbr.rel (0) target = $region5
    $region4: #{tpu_custom_call.1} parent=1 // pred_region
      %s13 = ssub.s32 256, 256
      %14 = vsyncadd [#allocation3], %s13
      %s15 = sshll.u32 [#allocation2], 4
      %s16 = int_to_ptr.vmem [resolvable:$true] %s15
      %21 = dma.hbm_to_vmem [thread:$0]  %s0, 256, %s16, [#allocation3], 128, 128, 8
    $region5: #{tpu_custom_call.1} parent=1 // pred_fallthru
      _
    // Predicated region
    $region6: #{tpu_custom_call.1} parent=1 // pred_check
      _
    $region7: #{tpu_custom_call.1} parent=1 // pred_check_branch
      %23 = sbr.rel (0) target = $region9
    $region8: #{tpu_custom_call.1} parent=1 // pred_region
      %s25 = ssub.s32 256, 256
      %26 = vsyncadd [#allocation5], %s25
      %s27 = sshll.u32 [#allocation4], 4
      %s28 = int_to_ptr.vmem [resolvable:$true] %s27
      %33 = dma.hbm_to_vmem [thread:$0]  %s1, 256, %s28, [#allocation5], 128, 128, 8
    $region9: #{tpu_custom_call.1} parent=1 // pred_fallthru
      _
    // Predicated region
    $region10: #{tpu_custom_call.1} parent=1 // pred_check
      _
    $region11: #{tpu_custom_call.1} parent=1 // pred_check_branch
      %35 = sbr.rel (0) target = $region13
    $region12: #{tpu_custom_call.1} parent=1 // pred_region
      %s37 = ssub.s32 256, 256
      %38 = vsyncadd [#allocation5], %s37
      %s39 = sshll.u32 [#allocation6], 4
      %s40 = int_to_ptr.vmem [resolvable:$true] %s39
      %45 = dma.hbm_to_vmem [thread:$0]  %s2, 256, %s40, [#allocation5], 128, 128, 8
    $region13: #{tpu_custom_call.1} parent=1 // pred_fallthru
      _
    // Predicated region
    $region14: #{tpu_custom_call.1} parent=1 // pred_check
      _
    $region15: #{tpu_custom_call.1} parent=1 // pred_check_branch
      %47 = sbr.rel (0) target = $region17
    $region16: #{tpu_custom_call.1} parent=1 // pred_region
      %48 = dma.done [#allocation3], 256
    $region17: #{tpu_custom_call.1} parent=1 // pred_fallthru
      _
    // Predicated region
    $region18: #{tpu_custom_call.1} parent=1 // pred_check
      _
    $region19: #{tpu_custom_call.1} parent=1 // pred_check_branch
      %50 = sbr.rel (0) target = $region21
    $region20: #{tpu_custom_call.1} parent=1 // pred_region
      %51 = dma.done [#allocation5], 256
    $region21: #{tpu_custom_call.1} parent=1 // pred_fallthru
      _
    // Predicated region
    $region22: #{tpu_custom_call.1} parent=1 // pred_check
      _
    $region23: #{tpu_custom_call.1} parent=1 // pred_check_branch
      %53 = sbr.rel (0) target = $region25
    $region24: #{tpu_custom_call.1} parent=1 // pred_region
      %54 = dma.done [#allocation5], 256
    $region25: #{tpu_custom_call.1} parent=1 // pred_fallthru
      _
    %v55 = vld [vmem:[#allocation2] sm:$0xff]
    %v56 = vld [vmem:[#allocation2 + $0x8] sm:$0xff]
    %v57 = vld [vmem:[#allocation4] sm:$0xff]
    %v58 = vld [vmem:[#allocation4 + $0x8] sm:$0xff]
    %v59 = vld [vmem:[#allocation6] sm:$0xff]
    %v60 = vld [vmem:[#allocation6 + $0x8] sm:$0xff]
    %v61 = vsub.f32 %v57, %v59
    %v62 = vsub.f32 %v58, %v60
    %v63 = vadd.f32 %v57, %v59
    %v64 = vadd.f32 %v58, %v60
    %v65 = vmul.f32 %v55, 2.0
    %v66 = vmul.f32 %v56, 2.0
    %v67 = vsub.f32 %v63, %v65
    %v68 = vsub.f32 %v64, %v66
    %v69 = vmul.f32 %v61, %v67
    %v70 = vmul.f32 %v62, %v68
    %vm71 = vcmask 261120
    %v72 = vsel %vm71, %v69, 0.0
    %73 = vadd.xlane.f32.xlu0 %v72
    %v74 = vpop.xlane.xlu0 %73
    %v75 = vsel %vm71, %v70, 0.0
    %76 = vadd.xlane.f32.xlu0 %v75
    %v77 = vpop.xlane.xlu0 %76
    %v78 = vadd.f32 %v74, 1.0
    %v79 = vadd.f32 %v77, 1.0
    %v80 = vmax.f32 %v78, 0.0
    %v81 = vmax.f32 %v79, 0.0
    %s82 = smul.u32 0, 16
    %v83 = vlaneseq
    %v84 = vshrl.u32 %v83, 7
    %v85 = vadd.s32 %v84, 8
    %v86 = vstv %s82
    %v87 = vadd.s32 %v86, %v84
    %v88 = vadd.s32 %v86, %v85
    %vm89 = vcmp.lt.s32.totalorder %v87, 16
    %vm90 = vcmp.lt.s32.totalorder %v88, 16
    %v91 = vsel %vm89, %v80, 0.0
    %v92 = vsel %vm90, %v81, 0.0
    %vm93 = vcmask 7168
    %94 = vst.msk [vmem:[%s3] sm:$0xff] %vm93, %v91
    %95 = vst.msk [vmem:[%s3 + $0x8] sm:$0xff] %vm93, %v92
    // Predicated region
    $region26: #{tpu_custom_call.1} parent=1 // pred_check
      _
    $region27: #{tpu_custom_call.1} parent=1 // pred_check_branch
      %97 = sbr.rel (0) target = $region29
    $region28: #{tpu_custom_call.1} parent=1 // pred_region
      _
    $region29: #{tpu_custom_call.1} parent=1 // pred_fallthru
      _
    // Predicated region
    $region30: #{tpu_custom_call.1} parent=1 // pred_check
      _
    $region31: #{tpu_custom_call.1} parent=1 // pred_check_branch
      %99 = sbr.rel (0) target = $region33
    $region32: #{tpu_custom_call.1} parent=1 // pred_region
      _
    $region33: #{tpu_custom_call.1} parent=1 // pred_fallthru
      _
    %100 = vsyncpa [#allocation3], 1
    %101 = vsyncpa [#allocation5], 1

</llo_original>
